<compile_context>
chip_gen: v5e
topology: v5e:2x2
jax: 0.10.0
libtpu: 0.0.40
codegen_flags: <defaults>
</compile_context>

<pallas_src>
import jax
import jax.numpy as jnp
from jax.experimental import pallas as pl
from jax.experimental.pallas import tpu as pltpu


def _round_up(x, m):
    return (x + m - 1) // m * m


def _make_kernel(r_dim, vpu_se_max=16):
    """Kernel over one batch tile.

    refs: emb [TB, M] bf16, wf [M, H] bf16, bias [1, H] f32,
          ws_t [R, H] f32 (squeeze weight, transposed), we [R, H] f32,
          out [TB, H] f32.
    """
    def kernel(emb_ref, wf_ref, b_ref, wst_ref, we_ref, out_ref):
        # Fusion Linear: single MXU dot over the whole concatenated K dim,
        # f32 accumulation.  Bias add stays f32 on the VPU.
        x = jnp.dot(emb_ref[...], wf_ref[...], preferred_element_type=jnp.float32)
        x = x + b_ref[...]                                   # [TB, H] f32

        wst = wst_ref[...]                                   # [R, H] f32
        we = we_ref[...]                                     # [R, H] f32

        if r_dim <= vpu_se_max:
            # SENet entirely off the MXU (frees the MXU for the fusion matmul):
            #   squeeze: s_r = sum_h x[:,h] * Ws[h,r]   (VPU mul + XLU lane-reduce)
            #   excite : e   = sum_r relu(s_r) * We[r,:] (VPU outer-product accum)
            # All in f32 -> tighter numerics than routing these tiny dots via bf16.
            e = None
            for r in range(r_dim):                           # static, unrolled (R small)
                s = jnp.sum(x * wst[r:r + 1, :], axis=-1, keepdims=True)  # [TB, 1]
                s = jnp.maximum(s, 0.0)                                   # ReLU
                t = s * we[r:r + 1, :]                                    # [TB, H]
                e = t if e is None else e + t
        else:
            # Fallback for unusually large squeeze dims: keep them on the MXU.
            s = jax.lax.dot_general(x, wst, (((1,), (1,)), ((), ())),
                                    preferred_element_type=jnp.float32)   # [TB, R]
            e = jnp.dot(jnp.maximum(s, 0.0), we,
                        preferred_element_type=jnp.float32)               # [TB, H]

        g = jax.nn.sigmoid(e)                                # f32, EUP
        out_ref[...] = (x * g).astype(out_ref.dtype)
    return kernel


def concat_dense_se(inputs, w_fusion, b_fusion, w_squeeze, w_excite,
                    *, tb=1024, matmul_dtype=jnp.bfloat16):
    """inputs:    list of [B, d_i] arrays
    w_fusion:  [M, H]   pre-transposed (M = sum d_i)
    b_fusion:  [H]
    w_squeeze: [H, R]   pre-transposed (R = H // se_ratio)
    w_excite:  [R, H]   pre-transposed
    Returns [B, H] float32.
    """
    if len(inputs) == 1:
        emb = inputs[0].astype(matmul_dtype)
    else:
        # Single XLA pass: concat fused with the bf16 cast.  The kernel then needs
        # only one K = M MXU push train per 8 rows (vs. one per input before).
        emb = jnp.concatenate([x.astype(matmul_dtype) for x in inputs], axis=1)

    B, M = emb.shape
    H = int(w_fusion.shape[1])
    R = int(w_squeeze.shape[1])
    assert w_fusion.shape[0] == M
    assert w_squeeze.shape == (H, R) and w_excite.shape == (R, H)

    wf = w_fusion.astype(matmul_dtype)                # [M, H] MXU operand
    bf = b_fusion.reshape(1, H).astype(jnp.float32)   # [1, H]
    wst = w_squeeze.T.astype(jnp.float32)             # [R, H] lane-aligned rows
    we = w_excite.astype(jnp.float32)                 # [R, H]

    # Batch tiling: 8-aligned tiles; cap so the grid has >= 2 steps (v7x megacore).
    tb = _round_up(max(int(tb), 8), 8)
    tb_eff = min(tb, _round_up(pl.cdiv(B, 2), 8))
    grid = (pl.cdiv(B, tb_eff),)                      # ragged tail handled by Pallas

    def batch_spec(cols):                             # batch-tiled, double-buffered
        return pl.BlockSpec((tb_eff, cols), lambda i: (i, 0))

    def resident(shape):                              # weights/bias: same block always
        return pl.BlockSpec(shape, lambda i: (0, 0))

    cost = pl.CostEstimate(
        flops=2 * B * (M * H + 2 * H * R) + 4 * B * H,
        transcendentals=B * H,                        # sigmoid
        bytes_accessed=(B * M * jnp.dtype(matmul_dtype).itemsize   # emb
                        + M * H * jnp.dtype(matmul_dtype).itemsize  # wf
                        + (H + 2 * R * H) * 4                       # bias, ws_t, we
                        + B * H * 4),                               # out
    )

    return pl.pallas_call(
        _make_kernel(R),
        grid=grid,
        in_specs=[batch_spec(M), resident((M, H)), resident((1, H)),
                  resident((R, H)), resident((R, H))],
        out_specs=batch_spec(H),
        out_shape=jax.ShapeDtypeStruct((B, H), jnp.float32),
        compiler_params=pltpu.CompilerParams(dimension_semantics=("parallel",)),
        cost_estimate=cost,
    )(emb, wf, bf, wst, we)


def reference(inputs, w_fusion, b_fusion, w_squeeze, w_excite):
    x = jnp.concatenate(inputs, axis=1) @ w_fusion + b_fusion
    g = jax.nn.sigmoid(jnp.maximum(x @ w_squeeze, 0.0) @ w_excite)
    return x * g


if __name__ == "__main__":
    # Shapes consistent with the module: two modality embeddings of width 32
    # -> multimodal_hidden_size M = 64, hidden_size H = 32, se_ratio = 8 -> R = 4.
    H, RATIO = 32, 8
    R = H // RATIO
    D1 = D2 = 32
    M = D1 + D2

    key = jax.random.PRNGKey(0)
    k3, k4, k5, k6, k7 = jax.random.split(key, 5)

    # Deterministic synthetic parameters (PyTorch Linear weights pre-transposed to [in, out]).
    w_fusion = jax.random.normal(k3, (M, H), jnp.float32) * (1.0 / jnp.sqrt(M))
    b_fusion = jax.random.normal(k4, (H,), jnp.float32) * 0.02
    w_squeeze = jax.random.normal(k5, (H, R), jnp.float32) * (1.0 / jnp.sqrt(H))
    w_excite = jax.random.normal(k6, (R, H), jnp.float32) * (1.0 / jnp.sqrt(R))

    # B=32: even 2-step grid (both TensorCores on v7x).
    # B=19: ragged tail block (no wrapper pad, no output slice).
    for B in (32, 19):
        kx1, kx2 = jax.random.split(jax.random.fold_in(k7, B))
        x1 = jax.random.normal(kx1, (B, D1), jnp.float32)
        x2 = jax.random.normal(kx2, (B, D2), jnp.float32)

        out = concat_dense_se([x1, x2], w_fusion, b_fusion, w_squeeze, w_excite)
        out = jax.block_until_ready(out)

        ref = reference([x1, x2], w_fusion, b_fusion, w_squeeze, w_excite)
        assert out.shape == (B, H)
        # bf16 MXU operands for the fusion matmul (f32 accumulate); SE block is
        # full f32 -> comfortably within 3e-2 of the f32 reference.
        assert jnp.allclose(out, ref, atol=3e-2, rtol=3e-2), f"mismatch vs reference at B={B}"

    print("KERNEL_OK")
</pallas_src>

<mosaic_0001>
module attributes {stable_mosaic.version = 11 : i64} {
  func.func @kernel(%arg0: i32, %arg1: memref<16x64xbf16, #tpu.memory_space<vmem>>, %arg2: memref<64x32xbf16, #tpu.memory_space<vmem>>, %arg3: memref<1x32xf32, #tpu.memory_space<vmem>>, %arg4: memref<4x32xf32, #tpu.memory_space<vmem>>, %arg5: memref<4x32xf32, #tpu.memory_space<vmem>>, %arg6: memref<16x32xf32, #tpu.memory_space<vmem>>) attributes {dimension_semantics = [#tpu.dimension_semantics<parallel>], iteration_bounds = array<i64: 2>, scalar_prefetch = 0 : i64, scratch_operands = 0 : i64, tpu.core_type = #tpu.core_type<tc>, window_params = [{transform_indices = @transform_0, window_bounds = array<i64: 16, 64>}, {pipeline_mode = #tpu.pipeline_mode<synchronous>, transform_indices = @transform_1, window_bounds = array<i64: 64, 32>}, {pipeline_mode = #tpu.pipeline_mode<synchronous>, transform_indices = @transform_2, window_bounds = array<i64: 1, 32>}, {pipeline_mode = #tpu.pipeline_mode<synchronous>, transform_indices = @transform_3, window_bounds = array<i64: 4, 32>}, {pipeline_mode = #tpu.pipeline_mode<synchronous>, transform_indices = @transform_4, window_bounds = array<i64: 4, 32>}, {transform_indices = @transform_5, window_bounds = array<i64: 16, 32>}]} {
    %c0 = arith.constant 0 : index
    %c0_0 = arith.constant 0 : index
    %0 = vector.load %arg1[%c0, %c0_0] : memref<16x64xbf16, #tpu.memory_space<vmem>>, vector<16x64xbf16>
    %c0_1 = arith.constant 0 : index
    %c0_2 = arith.constant 0 : index
    %1 = vector.load %arg2[%c0_1, %c0_2] : memref<64x32xbf16, #tpu.memory_space<vmem>>, vector<64x32xbf16>
    %cst = arith.constant dense<0.000000e+00> : vector<16x32xf32>
    %2 = tpu.matmul %0, %1, %cst {dimension_numbers = #tpu.dot_dimension_numbers<[1], [0], [0], [1], [0, 0, 1, 1], [], []>} : vector<16x64xbf16>, vector<64x32xbf16>, vector<16x32xf32> -> vector<16x32xf32>
    %c0_3 = arith.constant 0 : index
    %c0_4 = arith.constant 0 : index
    %3 = vector.load %arg3[%c0_3, %c0_4] : memref<1x32xf32, #tpu.memory_space<vmem>>, vector<1x32xf32>
    %4 = vector.broadcast %3 : vector<1x32xf32> to vector<16x32xf32>
    %5 = arith.addf %2, %4 : vector<16x32xf32>
    %c0_5 = arith.constant 0 : index
    %c0_6 = arith.constant 0 : index
    %6 = vector.load %arg4[%c0_5, %c0_6] : memref<4x32xf32, #tpu.memory_space<vmem>>, vector<4x32xf32>
    %c0_7 = arith.constant 0 : index
    %c0_8 = arith.constant 0 : index
    %7 = vector.load %arg5[%c0_7, %c0_8] : memref<4x32xf32, #tpu.memory_space<vmem>>, vector<4x32xf32>
    %8 = vector.extract_strided_slice %6 {offsets = [0, 0], sizes = [1, 32], strides = [1, 1]} : vector<4x32xf32> to vector<1x32xf32>
    %9 = vector.broadcast %8 : vector<1x32xf32> to vector<16x32xf32>
    %10 = arith.mulf %5, %9 : vector<16x32xf32>
    %cst_9 = arith.constant dense<0.000000e+00> : vector<16xf32>
    %11 = vector.multi_reduction <add>, %10, %cst_9 [1] : vector<16x32xf32> to vector<16xf32>
    %12 = vector.shape_cast %11 : vector<16xf32> to vector<16x1xf32>
    %cst_10 = arith.constant 0.000000e+00 : f32
    %13 = vector.broadcast %cst_10 : f32 to vector<16x1xf32>
    %14 = arith.maximumf %12, %13 : vector<16x1xf32>
    %15 = vector.extract_strided_slice %7 {offsets = [0, 0], sizes = [1, 32], strides = [1, 1]} : vector<4x32xf32> to vector<1x32xf32>
    %16 = vector.broadcast %14 : vector<16x1xf32> to vector<16x32xf32>
    %17 = vector.broadcast %15 : vector<1x32xf32> to vector<16x32xf32>
    %18 = arith.mulf %16, %17 : vector<16x32xf32>
    %19 = vector.extract_strided_slice %6 {offsets = [1, 0], sizes = [1, 32], strides = [1, 1]} : vector<4x32xf32> to vector<1x32xf32>
    %20 = vector.broadcast %19 : vector<1x32xf32> to vector<16x32xf32>
    %21 = arith.mulf %5, %20 : vector<16x32xf32>
    %cst_11 = arith.constant dense<0.000000e+00> : vector<16xf32>
    %22 = vector.multi_reduction <add>, %21, %cst_11 [1] : vector<16x32xf32> to vector<16xf32>
    %23 = vector.shape_cast %22 : vector<16xf32> to vector<16x1xf32>
    %cst_12 = arith.constant 0.000000e+00 : f32
    %24 = vector.broadcast %cst_12 : f32 to vector<16x1xf32>
    %25 = arith.maximumf %23, %24 : vector<16x1xf32>
    %26 = vector.extract_strided_slice %7 {offsets = [1, 0], sizes = [1, 32], strides = [1, 1]} : vector<4x32xf32> to vector<1x32xf32>
    %27 = vector.broadcast %25 : vector<16x1xf32> to vector<16x32xf32>
    %28 = vector.broadcast %26 : vector<1x32xf32> to vector<16x32xf32>
    %29 = arith.mulf %27, %28 : vector<16x32xf32>
    %30 = arith.addf %18, %29 : vector<16x32xf32>
    %31 = vector.extract_strided_slice %6 {offsets = [2, 0], sizes = [1, 32], strides = [1, 1]} : vector<4x32xf32> to vector<1x32xf32>
    %32 = vector.broadcast %31 : vector<1x32xf32> to vector<16x32xf32>
    %33 = arith.mulf %5, %32 : vector<16x32xf32>
    %cst_13 = arith.constant dense<0.000000e+00> : vector<16xf32>
    %34 = vector.multi_reduction <add>, %33, %cst_13 [1] : vector<16x32xf32> to vector<16xf32>
    %35 = vector.shape_cast %34 : vector<16xf32> to vector<16x1xf32>
    %cst_14 = arith.constant 0.000000e+00 : f32
    %36 = vector.broadcast %cst_14 : f32 to vector<16x1xf32>
    %37 = arith.maximumf %35, %36 : vector<16x1xf32>
    %38 = vector.extract_strided_slice %7 {offsets = [2, 0], sizes = [1, 32], strides = [1, 1]} : vector<4x32xf32> to vector<1x32xf32>
    %39 = vector.broadcast %37 : vector<16x1xf32> to vector<16x32xf32>
    %40 = vector.broadcast %38 : vector<1x32xf32> to vector<16x32xf32>
    %41 = arith.mulf %39, %40 : vector<16x32xf32>
    %42 = arith.addf %30, %41 : vector<16x32xf32>
    %43 = vector.extract_strided_slice %6 {offsets = [3, 0], sizes = [1, 32], strides = [1, 1]} : vector<4x32xf32> to vector<1x32xf32>
    %44 = vector.broadcast %43 : vector<1x32xf32> to vector<16x32xf32>
    %45 = arith.mulf %5, %44 : vector<16x32xf32>
    %cst_15 = arith.constant dense<0.000000e+00> : vector<16xf32>
    %46 = vector.multi_reduction <add>, %45, %cst_15 [1] : vector<16x32xf32> to vector<16xf32>
    %47 = vector.shape_cast %46 : vector<16xf32> to vector<16x1xf32>
    %cst_16 = arith.constant 0.000000e+00 : f32
    %48 = vector.broadcast %cst_16 : f32 to vector<16x1xf32>
    %49 = arith.maximumf %47, %48 : vector<16x1xf32>
    %50 = vector.extract_strided_slice %7 {offsets = [3, 0], sizes = [1, 32], strides = [1, 1]} : vector<4x32xf32> to vector<1x32xf32>
    %51 = vector.broadcast %49 : vector<16x1xf32> to vector<16x32xf32>
    %52 = vector.broadcast %50 : vector<1x32xf32> to vector<16x32xf32>
    %53 = arith.mulf %51, %52 : vector<16x32xf32>
    %54 = arith.addf %42, %53 : vector<16x32xf32>
    %55 = arith.negf %54 : vector<16x32xf32>
    %56 = math.exp %55 : vector<16x32xf32>
    %cst_17 = arith.constant 1.000000e+00 : f32
    %57 = vector.broadcast %cst_17 : f32 to vector<16x32xf32>
    %58 = arith.addf %57, %56 : vector<16x32xf32>
    %59 = arith.divf %57, %58 : vector<16x32xf32>
    %60 = arith.mulf %5, %59 : vector<16x32xf32>
    %c0_18 = arith.constant 0 : index
    %c0_19 = arith.constant 0 : index
    %61 = vector.load %arg6[%c0_18, %c0_19] : memref<16x32xf32, #tpu.memory_space<vmem>>, vector<16x32xf32>
    tpu.vector_store %arg6[%c0_18, %c0_19], %60 {strides = array<i32>} : memref<16x32xf32, #tpu.memory_space<vmem>>, vector<16x32xf32>,
    return
  }
  func.func @transform_0(%arg0: i32) -> (i32, i32) {
    %c0_i32 = arith.constant 0 : i32
    %c0_i32_0 = arith.constant 0 : i32
    return %arg0, %c0_i32 : i32, i32
  }
  func.func @transform_1(%arg0: i32) -> (i32, i32) {
    %c0_i32 = arith.constant 0 : i32
    %c0_i32_0 = arith.constant 0 : i32
    %c0_i32_1 = arith.constant 0 : i32
    return %c0_i32, %c0_i32_0 : i32, i32
  }
  func.func @transform_2(%arg0: i32) -> (i32, i32) {
    %c0_i32 = arith.constant 0 : i32
    %c0_i32_0 = arith.constant 0 : i32
    %c0_i32_1 = arith.constant 0 : i32
    return %c0_i32, %c0_i32_0 : i32, i32
  }
  func.func @transform_3(%arg0: i32) -> (i32, i32) {
    %c0_i32 = arith.constant 0 : i32
    %c0_i32_0 = arith.constant 0 : i32
    %c0_i32_1 = arith.constant 0 : i32
    return %c0_i32, %c0_i32_0 : i32, i32
  }
  func.func @transform_4(%arg0: i32) -> (i32, i32) {
    %c0_i32 = arith.constant 0 : i32
    %c0_i32_0 = arith.constant 0 : i32
    %c0_i32_1 = arith.constant 0 : i32
    return %c0_i32, %c0_i32_0 : i32, i32
  }
  func.func @transform_5(%arg0: i32) -> (i32, i32) {
    %c0_i32 = arith.constant 0 : i32
    %c0_i32_0 = arith.constant 0 : i32
    return %arg0, %c0_i32 : i32, i32
  }
}

</mosaic_0001>

<llo_original>
// kernel: tpu_custom_call.1
$region0: #{tpu_custom_call.1}
  #allocation0 [shape = 'u32[]', space=smem, size = 0x4, offset = 0x4, fixed_abs, tag = 'smem constant byte address 0x4 - core index']
  #allocation1 [shape = 'u32[72,128]{1,0:T(1,128)}', space=vmem, size = 0x9000, scoped, tag = 'internal scratch']
  %s0 = inlined_call_operand.vmem [shape: bf16[32,64], index: 0, kind: input, shape index: {}]
  %s1 = inlined_call_operand.vmem [shape: bf16[64,32], index: 1, kind: input, shape index: {}]
  %s2 = inlined_call_operand.vmem [shape: f32[1,32], index: 2, kind: input, shape index: {}]
  %s3 = inlined_call_operand.vmem [shape: f32[4,32], index: 3, kind: input, shape index: {}]
  %s4 = inlined_call_operand.vmem [shape: f32[4,32], index: 4, kind: input, shape index: {}]
  %s5 = inlined_call_operand.hbm [shape: f32[32,32], index: 5, kind: output, shape index: {}]
  %s6 = sld [smem:[#allocation0]]
  $region53: #{tpu_custom_call.1} parent=0
    _
  %s8 = ssub.s32 1, %s6
  %s9 = scalar_select 0, %s8, %s6
  $region1: #{tpu_custom_call.1} parent=0
    #allocation2 [shape = 'u8[16384]{0}', space=vmem, size = 0x4000, scoped, tag = 'output window, operand 0']
    #allocation3 [shape = 's32[2]{0}', space=sflag, size = 0x8, scoped, tag = 'scoped memory for tpu_custom_call.1']
    %10 = vsyncpa [#allocation3], 0
    %s11 = scalar_lea.sflag [#allocation3], 1
    %12 = vsyncpa %s11, 0
    loop: start=0, step=1, limit=4
    $region2: #{tpu_custom_call.1} parent=1 // loop_pre_header
      _
    $region3: #{tpu_custom_call.1} parent=1 // loop_header
      %s14 = sphi 0, %s18
      %p15 = scmp.ge.s32.totalorder %s14, 4
      %s24 = sphi 0, %s26
      %s27 = sphi 0, %s24
      %s28 = sphi 0, %s27
      %s44 = sphi 0, %s28
      %s48 = sphi 0, %s48
      %s50 = sphi 0, %s48
      %s51 = sphi 0, %s50
      %s65 = sphi 0, %s51
      %s69 = sphi 0, %s69
      %s71 = sphi 0, %s69
      %s72 = sphi 0, %s71
      %s86 = sphi 0, %s72
      %s90 = sphi 0, %s90
      %s92 = sphi 0, %s90
      %s93 = sphi 0, %s92
      %s107 = sphi 0, %s93
      %s111 = sphi 0, %s111
      %s113 = sphi 0, %s111
      %s114 = sphi 0, %s113
      %s128 = sphi 0, %s114
      %s134 = sphi 0, %s136
      %s137 = sphi 0, %s134
      %s138 = sphi 0, %s137
      %s154 = sphi 0, %s138
    $region4: #{tpu_custom_call.1} parent=1 // loop_header_branch
      %17 = sbr.rel (%p15) target = $region8
    $region5: #{tpu_custom_call.1} parent=1 // loop_body
      %s19 = ssub.s32 %s14, 1
      %s20 = ssub.s32 %s14, 2
      %s21 = sadd.s32 %s14, 1
      %s22 = ssub.s32 %s14, %s21
      %p23 = scmp.eq.s32.totalorder %s22, 0
      %s25 = sadd.s32 %s24, 1
      %s26 = scalar_select %p23, %s24, %s25
      %p29 = pneg %p23
      %p30 = scmp.eq.s32.totalorder %s14, 1
      %p31 = por %p29, %p30
      %p32 = scmp.ne.s32.totalorder %s24, %s27
      %p33 = scmp.eq.s32.totalorder %s14, 0
      %p34 = por %p32, %p33
      %p35 = scmp.ne.s32.totalorder %s24, %s27
      %p36 = scmp.eq.s32.totalorder %s19, 1
      %p37 = por %p35, %p36
      %p38 = scmp.ne.s32.totalorder %s27, %s28
      %p39 = scmp.eq.s32.totalorder %s19, 0
      %p40 = por %p38, %p39
      %p41 = scmp.ne.s32.totalorder %s27, %s28
      %p42 = scmp.eq.s32.totalorder %s20, 1
      %p43 = por %p41, %p42
      %p45 = scmp.ne.s32.totalorder %s28, %s44
      %p46 = scmp.eq.s32.totalorder %s20, 0
      %p47 = por %p45, %p46
      %s49 = sadd.s32 %s48, 1
      %p52 = scmp.eq.s32.totalorder %s14, 1
      %p53 = scmp.ne.s32.totalorder %s48, %s50
      %p54 = scmp.eq.s32.totalorder %s14, 0
      %p55 = por %p53, %p54
      %p56 = scmp.ne.s32.totalorder %s48, %s50
      %p57 = scmp.eq.s32.totalorder %s19, 1
      %p58 = por %p56, %p57
      %p59 = scmp.ne.s32.totalorder %s50, %s51
      %p60 = scmp.eq.s32.totalorder %s19, 0
      %p61 = por %p59, %p60
      %p62 = scmp.ne.s32.totalorder %s50, %s51
      %p63 = scmp.eq.s32.totalorder %s20, 1
      %p64 = por %p62, %p63
      %p66 = scmp.ne.s32.totalorder %s51, %s65
      %p67 = scmp.eq.s32.totalorder %s20, 0
      %p68 = por %p66, %p67
      %s70 = sadd.s32 %s69, 1
      %p73 = scmp.eq.s32.totalorder %s14, 1
      %p74 = scmp.ne.s32.totalorder %s69, %s71
      %p75 = scmp.eq.s32.totalorder %s14, 0
      %p76 = por %p74, %p75
      %p77 = scmp.ne.s32.totalorder %s69, %s71
      %p78 = scmp.eq.s32.totalorder %s19, 1
      %p79 = por %p77, %p78
      %p80 = scmp.ne.s32.totalorder %s71, %s72
      %p81 = scmp.eq.s32.totalorder %s19, 0
      %p82 = por %p80, %p81
      %p83 = scmp.ne.s32.totalorder %s71, %s72
      %p84 = scmp.eq.s32.totalorder %s20, 1
      %p85 = por %p83, %p84
      %p87 = scmp.ne.s32.totalorder %s72, %s86
      %p88 = scmp.eq.s32.totalorder %s20, 0
      %p89 = por %p87, %p88
      %s91 = sadd.s32 %s90, 1
      %p94 = scmp.eq.s32.totalorder %s14, 1
      %p95 = scmp.ne.s32.totalorder %s90, %s92
      %p96 = scmp.eq.s32.totalorder %s14, 0
      %p97 = por %p95, %p96
      %p98 = scmp.ne.s32.totalorder %s90, %s92
      %p99 = scmp.eq.s32.totalorder %s19, 1
      %p100 = por %p98, %p99
      %p101 = scmp.ne.s32.totalorder %s92, %s93
      %p102 = scmp.eq.s32.totalorder %s19, 0
      %p103 = por %p101, %p102
      %p104 = scmp.ne.s32.totalorder %s92, %s93
      %p105 = scmp.eq.s32.totalorder %s20, 1
      %p106 = por %p104, %p105
      %p108 = scmp.ne.s32.totalorder %s93, %s107
      %p109 = scmp.eq.s32.totalorder %s20, 0
      %p110 = por %p108, %p109
      %s112 = sadd.s32 %s111, 1
      %p115 = scmp.eq.s32.totalorder %s14, 1
      %p116 = scmp.ne.s32.totalorder %s111, %s113
      %p117 = scmp.eq.s32.totalorder %s14, 0
      %p118 = por %p116, %p117
      %p119 = scmp.ne.s32.totalorder %s111, %s113
      %p120 = scmp.eq.s32.totalorder %s19, 1
      %p121 = por %p119, %p120
      %p122 = scmp.ne.s32.totalorder %s113, %s114
      %p123 = scmp.eq.s32.totalorder %s19, 0
      %p124 = por %p122, %p123
      %p125 = scmp.ne.s32.totalorder %s113, %s114
      %p126 = scmp.eq.s32.totalorder %s20, 1
      %p127 = por %p125, %p126
      %p129 = scmp.ne.s32.totalorder %s114, %s128
      %p130 = scmp.eq.s32.totalorder %s20, 0
      %p131 = por %p129, %p130
      %s132 = ssub.s32 %s14, %s21
      %p133 = scmp.eq.s32.totalorder %s132, 0
      %s135 = sadd.s32 %s134, 1
      %s136 = scalar_select %p133, %s134, %s135
      %p139 = pneg %p133
      %p140 = scmp.eq.s32.totalorder %s14, 1
      %p141 = por %p139, %p140
      %p142 = scmp.ne.s32.totalorder %s134, %s137
      %p143 = scmp.eq.s32.totalorder %s14, 0
      %p144 = por %p142, %p143
      %p145 = scmp.ne.s32.totalorder %s134, %s137
      %p146 = scmp.eq.s32.totalorder %s19, 1
      %p147 = por %p145, %p146
      %p148 = scmp.ne.s32.totalorder %s137, %s138
      %p149 = scmp.eq.s32.totalorder %s19, 0
      %p150 = por %p148, %p149
      %p151 = scmp.ne.s32.totalorder %s137, %s138
      %p152 = scmp.eq.s32.totalorder %s20, 1
      %p153 = por %p151, %p152
      %p155 = scmp.ne.s32.totalorder %s138, %s154
      %p156 = scmp.eq.s32.totalorder %s20, 0
      %p157 = por %p155, %p156
      %p158 = scmp.le.s32.totalorder 1, %s14
      %p159 = scmp.lt.s32.totalorder %s14, 3
      %p160 = pnand %p158, %p159
      %p161 = pneg %p160
      // Predicated region
      $region9: #{tpu_custom_call.1} parent=5 // pred_check
        _
      $region10: #{tpu_custom_call.1} parent=5 // pred_check_branch
        %163 = sbr.rel (%p160) target = $region12
      $region11: #{tpu_custom_call.1} parent=5 // pred_region
        %s164 = ssub.s32 %s14, 1
        // Predicated region
        $region13: #{tpu_custom_call.1} parent=11 // pred_check
          %p165 = pneg %p61
        $region14: #{tpu_custom_call.1} parent=11 // pred_check_branch
          %167 = sbr.rel (%p165) target = $region16
        $region15: #{tpu_custom_call.1} parent=11 // pred_region
          _
        $region16: #{tpu_custom_call.1} parent=11 // pred_fallthru
          _
        // Predicated region
        $region17: #{tpu_custom_call.1} parent=11 // pred_check
          %p168 = pneg %p82
        $region18: #{tpu_custom_call.1} parent=11 // pred_check_branch
          %170 = sbr.rel (%p168) target = $region20
        $region19: #{tpu_custom_call.1} parent=11 // pred_region
          _
        $region20: #{tpu_custom_call.1} parent=11 // pred_fallthru
          _
        // Predicated region
        $region21: #{tpu_custom_call.1} parent=11 // pred_check
          %p171 = pneg %p103
        $region22: #{tpu_custom_call.1} parent=11 // pred_check_branch
          %173 = sbr.rel (%p171) target = $region24
        $region23: #{tpu_custom_call.1} parent=11 // pred_region
          _
        $region24: #{tpu_custom_call.1} parent=11 // pred_fallthru
          _
        // Predicated region
        $region25: #{tpu_custom_call.1} parent=11 // pred_check
          %p174 = pneg %p124
        $region26: #{tpu_custom_call.1} parent=11 // pred_check_branch
          %176 = sbr.rel (%p174) target = $region28
        $region27: #{tpu_custom_call.1} parent=11 // pred_region
          _
        $region28: #{tpu_custom_call.1} parent=11 // pred_fallthru
          _
      $region12: #{tpu_custom_call.1} parent=5 // pred_fallthru
        _
      %p177 = scmp.lt.s32.totalorder %s14, 2
      // Predicated region
      $region29: #{tpu_custom_call.1} parent=5 // pred_check
        %p178 = pneg %p177
      $region30: #{tpu_custom_call.1} parent=5 // pred_check_branch
        %180 = sbr.rel (%p178) target = $region32
      $region31: #{tpu_custom_call.1} parent=5 // pred_region
        // Predicated region
        $region33: #{tpu_custom_call.1} parent=31 // pred_check
          %p181 = pneg %p34
        $region34: #{tpu_custom_call.1} parent=31 // pred_check_branch
          %183 = sbr.rel (%p181) target = $region36
        $region35: #{tpu_custom_call.1} parent=31 // pred_region
          %s184 = smul.u32 2, %s14
          %p185 = scmp.lt.s32.totalorder %s184, 3
          %s186 = scalar_select %p185, %s184, 3
          %s187 = smul.addr %s186, 4
          %s188 = scalar_lea.vmem %s0, %s187
          %s189 = smul.u32 2, %s14
        $region36: #{tpu_custom_call.1} parent=31 // pred_fallthru
          _
      $region32: #{tpu_custom_call.1} parent=5 // pred_fallthru
        _
      %p190 = scmp.le.s32.totalorder 1, %s14
      %p191 = scmp.lt.s32.totalorder %s14, 3
      %p192 = pnand %p190, %p191
      %p193 = pneg %p192
      // Predicated region
      $region37: #{tpu_custom_call.1} parent=5 // pred_check
        _
      $region38: #{tpu_custom_call.1} parent=5 // pred_check_branch
        %195 = sbr.rel (%p192) target = $region40
      $region39: #{tpu_custom_call.1} parent=5 // pred_region
        %s196 = ssub.s32 %s14, 1
        %s197 = smul.u32 2, %s19
        %p198 = scmp.lt.s32.totalorder %s197, 3
        %s199 = scalar_select %p198, %s197, 3
        %s200 = smul.addr %s199, 4
        %s201 = scalar_lea.vmem %s0, %s200
        %p202 = pneg %p40
        %p203 = pneg %p37
        %p204 = pneg %p61
        %p205 = pneg %p58
        %p206 = pneg %p82
        %p207 = pneg %p79
        %p208 = pneg %p103
        %p209 = pneg %p100
        %p210 = pneg %p124
        %p211 = pneg %p121
        %p212 = pneg %p150
        %p213 = pneg %p147
        %s214 = sand.u32 %s137, 1
        %s215 = scalar_lea.sflag [#allocation3], %s214
        %s216 = sand.u32 %s137, 1
        %s217 = smul.addr %s216, 16
        %s218 = scalar_lea.vmem [#allocation2], %s217
        %s219 = smul.u32 2, %s19
        %p220 = scmp.lt.s32.totalorder %s219, 3
        %s221 = scalar_select %p220, %s219, 3
        %s222 = smul.addr %s221, 4
        %s223 = scalar_lea.vmem %s0, %s222
        %s224 = smul.u32 2, %s19
        %s225 = smul.u32 2, %s19
        %v227 = vld [vmem:[%s223] sm:$0xf]
        %v228 = vld [vmem:[%s223 + $0x4] sm:$0xf]
        %v229 = vld [vmem:[%s1] sm:$0xf]
        %v230 = vld [vmem:[%s1 + $0x4] sm:$0xf]
        %v231 = vld [vmem:[%s1 + $0x8] sm:$0xf]
        %v232 = vld [vmem:[%s1 + $0xc] sm:$0xf]
        %v233 = vld [vmem:[%s1 + $0x10] sm:$0xf]
        %v234 = vld [vmem:[%s1 + $0x14] sm:$0xf]
        %v235 = vld [vmem:[%s1 + $0x18] sm:$0xf]
        %v236 = vld [vmem:[%s1 + $0x1c] sm:$0xf]
        %v237 = vld [vmem:[%s2] sm:$0x1]
        %v239 = vperm.slane %v237, 0
        %v243 = vunpack.c.l.b16 %v227
        %v244 = vunpack.c.l.b16 %v228
        %v245 = vpack.c.b16 %v244, %v243
        %v254 = vunpack.c.l.b16 %v229
        %v255 = vunpack.c.l.b16 %v230
        %v256 = vunpack.c.l.b16 %v231
        %v257 = vunpack.c.l.b16 %v232
        %v258 = vunpack.c.l.b16 %v233
        %v259 = vunpack.c.l.b16 %v234
        %v260 = vunpack.c.l.b16 %v235
        %v261 = vunpack.c.l.b16 %v236
        %v262 = vpack.c.b16 %v255, %v254
        %v263 = vpack.c.b16 %v257, %v256
        %v264 = vpack.c.b16 %v259, %v258
        %v265 = vpack.c.b16 %v261, %v260
        %vm270 = vcmask 523264
        %v272 = vsel %vm270, %v245, 0
        %274 = vmatpush.bf16.msra.mxu0 0
        %275 = vmatpush.bf16.msra.mxu0 0
        %276 = vmatpush.bf16.msra.mxu0 0
        %277 = vmatpush.bf16.msra.mxu0 0
        %278 = vmatpush.bf16.msra.mxu0 %v265
        %279 = vmatpush.bf16.msra.mxu0 %v264
        %280 = vmatpush.bf16.msra.mxu0 %v263
        %281 = vmatpush.bf16.msra.mxu0 %v262
        %282 = vmatmul.bf16.gmra.mxu0 %v272
        %v283 = vpop.f32.mrf.mxu0
        %v284 = vadd.f32 %v239, %v283
        %v285 = vpop.f32.mrf.mxu0
        %v286 = vadd.f32 %v239, %v285
        %287 = vdwg.mxu0
        %v288 = vld [vmem:[%s3] sm:$0xf]
        %v289 = vld [vmem:[%s4] sm:$0xf]
        %v290 = vperm.slane %v288, 0
        %v291 = vmul.f32 %v284, %v290
        %v292 = vmul.f32 %v286, %v290
        %vm293 = vcmask 261120
        %v294 = vsel %vm293, %v291, 0.0
        %295 = vadd.xlane.f32.xlu0 %v294
        %v296 = vpop.xlane.xlu0 %295
        %v297 = vsel %vm293, %v292, 0.0
        %298 = vadd.xlane.f32.xlu0 %v297
        %v299 = vpop.xlane.xlu0 %298
        %v300 = vmax.f32 %v296, 0.0
        %v301 = vmax.f32 %v299, 0.0
        %v302 = vperm.slane %v289, 0
        %v303 = vmul.f32 %v300, %v302
        %v304 = vmul.f32 %v301, %v302
        %v305 = vperm.slane %v288, 1
        %v306 = vmul.f32 %v284, %v305
        %v307 = vmul.f32 %v286, %v305
        %v308 = vsel %vm293, %v306, 0.0
        %309 = vadd.xlane.f32.xlu0 %v308
        %v310 = vpop.xlane.xlu0 %309
        %v311 = vsel %vm293, %v307, 0.0
        %312 = vadd.xlane.f32.xlu0 %v311
        %v313 = vpop.xlane.xlu0 %312
        %v314 = vmax.f32 %v310, 0.0
        %v315 = vmax.f32 %v313, 0.0
        %v316 = vperm.slane %v289, 1
        %v317 = vmul.f32 %v314, %v316
        %v318 = vmul.f32 %v315, %v316
        %v319 = vadd.f32 %v303, %v317
        %v320 = vadd.f32 %v304, %v318
        %v321 = vperm.slane %v288, 2
        %v322 = vmul.f32 %v284, %v321
        %v323 = vmul.f32 %v286, %v321
        %v324 = vsel %vm293, %v322, 0.0
        %325 = vadd.xlane.f32.xlu0 %v324
        %v326 = vpop.xlane.xlu0 %325
        %v327 = vsel %vm293, %v323, 0.0
        %328 = vadd.xlane.f32.xlu0 %v327
        %v329 = vpop.xlane.xlu0 %328
        %v330 = vmax.f32 %v326, 0.0
        %v331 = vmax.f32 %v329, 0.0
        %v332 = vperm.slane %v289, 2
        %v333 = vmul.f32 %v330, %v332
        %v334 = vmul.f32 %v331, %v332
        %v335 = vadd.f32 %v319, %v333
        %v336 = vadd.f32 %v320, %v334
        %v337 = vperm.slane %v288, 3
        %v338 = vmul.f32 %v284, %v337
        %v339 = vmul.f32 %v286, %v337
        %v340 = vsel %vm293, %v338, 0.0
        %341 = vadd.xlane.f32.xlu0 %v340
        %v342 = vpop.xlane.xlu0 %341
        %v343 = vsel %vm293, %v339, 0.0
        %344 = vadd.xlane.f32.xlu0 %v343
        %v345 = vpop.xlane.xlu0 %344
        %v346 = vmax.f32 %v342, 0.0
        %v347 = vmax.f32 %v345, 0.0
        %v348 = vperm.slane %v289, 3
        %v349 = vmul.f32 %v346, %v348
        %v350 = vmul.f32 %v347, %v348
        %v351 = vadd.f32 %v335, %v349
        %v352 = vadd.f32 %v336, %v350
        %v353 = vxor.u32 %v351, 2147483648
        %v354 = vxor.u32 %v352, 2147483648
        %v355 = vmul.f32 %v353, 1.442695
        %v356 = vpow.pop %v355
        %v357 = vmul.f32 %v354, 1.442695
        %v358 = vpow.pop %v357
        %v359 = vadd.f32 %v356, 1.0
        %v360 = vadd.f32 %v358, 1.0
        %v361 = vrcp.pop %v359
        %v362 = vmul.f32 %v359, %v361
        %v363 = vsub.f32 1.0, %v362
        %v364 = vmul.f32 %v361, %v363
        %v365 = vadd.f32 %v361, %v364
        %vm366 = vweird.f32 %v359
        %vm367 = vweird.f32 %v361
        %vm368 = vmor %vm366, %vm367
        %v369 = vsel %vm368, %v361, %v365
        %v370 = vand.u32 2147483647, %v359
        %vm371 = vcmp.eq.f32.partialorder %v370, 8.507059e+37
        %v372 = vand.u32 %v359, 2147483648
        %v373 = vor.u32 1.1754944e-38, %v372
        %v374 = vsel %vm371, %v373, %v369
        %v375 = vmul.f32 1.0, %v374
        %v376 = vrcp.pop %v360
        %v377 = vmul.f32 %v360, %v376
        %v378 = vsub.f32 1.0, %v377
        %v379 = vmul.f32 %v376, %v378
        %v380 = vadd.f32 %v376, %v379
        %vm381 = vweird.f32 %v360
        %vm382 = vweird.f32 %v376
        %vm383 = vmor %vm381, %vm382
        %v384 = vsel %vm383, %v376, %v380
        %v385 = vand.u32 2147483647, %v360
        %vm386 = vcmp.eq.f32.partialorder %v385, 8.507059e+37
        %v387 = vand.u32 %v360, 2147483648
        %v388 = vor.u32 1.1754944e-38, %v387
        %v389 = vsel %vm386, %v388, %v384
        %v390 = vmul.f32 1.0, %v389
        %v391 = vmul.f32 %v284, %v375
        %v392 = vmul.f32 %v286, %v390
        %393 = vst.msk [vmem:[%s218] sm:$0xff] %vm293, %v391
        %394 = vst.msk [vmem:[%s218 + $0x8] sm:$0xff] %vm293, %v392
        %s395 = sand.u32 %s137, 1
        %s396 = scalar_lea.sflag [#allocation3], %s395
        %s397 = sand.u32 %s137, 1
        %s398 = smul.addr %s397, 16
        %s399 = scalar_lea.vmem [#allocation2], %s398
        // Predicated region
        $region41: #{tpu_custom_call.1} parent=39 // pred_check
          %p400 = pneg %p147
        $region42: #{tpu_custom_call.1} parent=39 // pred_check_branch
          %402 = sbr.rel (%p400) target = $region44
        $region43: #{tpu_custom_call.1} parent=39 // pred_region
          %s403 = smul.u32 2, %s19
          %405 = vsyncadd %s396, 0
          %s406 = smul.addr %s403, 8
          %s407 = scalar_lea.hbm %s5, %s406
          %s408 = sshll.u32 %s399, 4
          %s409 = int_to_ptr.vmem [resolvable:$true] %s408
          %s410 = sshll.u32 %s407, 4
          %s411 = int_to_ptr.hbm [resolvable:$true] %s410
          %416 = dma.vmem_to_hbm [thread:$0]  %s409, 256, %s411, %s396, 128, 128, 8
        $region44: #{tpu_custom_call.1} parent=39 // pred_fallthru
          _
      $region40: #{tpu_custom_call.1} parent=5 // pred_fallthru
        _
      %p417 = scmp.le.s32.totalorder 2, %s14
      // Predicated region
      $region45: #{tpu_custom_call.1} parent=5 // pred_check
        %p418 = pneg %p417
      $region46: #{tpu_custom_call.1} parent=5 // pred_check_branch
        %420 = sbr.rel (%p418) target = $region48
      $region47: #{tpu_custom_call.1} parent=5 // pred_region
        %s421 = ssub.s32 %s14, 2
        // Predicated region
        $region49: #{tpu_custom_call.1} parent=47 // pred_check
          %p422 = pneg %p153
        $region50: #{tpu_custom_call.1} parent=47 // pred_check_branch
          %424 = sbr.rel (%p422) target = $region52
        $region51: #{tpu_custom_call.1} parent=47 // pred_region
          %s425 = sand.u32 %s138, 1
          %s426 = scalar_lea.sflag [#allocation3], %s425
          %s427 = sand.u32 %s138, 1
          %s428 = smul.addr %s427, 16
          %s429 = scalar_lea.vmem [#allocation2], %s428
          %431 = dma.done %s426, 256
        $region52: #{tpu_custom_call.1} parent=47 // pred_fallthru
          _
      $region48: #{tpu_custom_call.1} parent=5 // pred_fallthru
        _
    $region6: #{tpu_custom_call.1} parent=1 // loop_footer
      %s18 = sadd.s32 1, %s14
    $region7: #{tpu_custom_call.1} parent=1 // loop_footer_branch
      %13 = sbr.rel target = $region3
    $region8: #{tpu_custom_call.1} parent=1 // loop_exit
      _
    %432 = vsyncpa [#allocation3], 1
    %s433 = scalar_lea.sflag [#allocation3], 1
    %434 = vsyncpa %s433, 1

</llo_original>
